<compile_context>
chip_gen: v7x
topology: tpu7x:2x2x1
jax: 0.10.0
libtpu: 0.0.40
codegen_flags: <defaults>
</compile_context>

<pallas_src>
import functools

import jax
import jax.numpy as jnp
from jax.experimental import pallas as pl
from jax.experimental.pallas import tpu as pltpu

CLIPMAX = 1000000.0
CLIPMIN = 1e-05

# All three quantizers: dynamic, per-tensor, asymmetric, 8-bit.
BITS = 8
Q_MIN = 0.0
Q_MAX = float(2 ** BITS - 1)     # 255

LANES = 128
SUBLANES = 8
VMEM_LIMIT_BYTES = 32 * 1024 * 1024
# <= 2 MiB of f32 working tensor -> fully VMEM-resident single-kernel path.
FAST_PATH_MAX_ELEMS = 512 * 1024


def _round_up(n, m):
    return ((n + m - 1) // m) * m


def _pick_tile_rows():
    """Per-generation row tile (f32 tile bytes = rows * 512)."""
    try:
        kind = jax.devices()[0].device_kind.lower()
    except Exception:
        return 2048
    if "v5" in kind:
        return 1024   # v5e: 0.8 TB/s, 16 MiB scoped-VMEM default -> 512 KiB tiles
    if "v6" in kind:
        return 2048   # v6e: ~86% roofline already at 1k rows; 1 MiB tiles
    return 4096       # v7x+: 3.2 TB/s per TC -> amortize the ~0.35 us step cost


TILE_ROWS = _pick_tile_rows()


def _fq(v, scale, inv_scale, offset):
    """Asymmetric fake-quant with precomputed scale / reciprocal / offset."""
    q = jnp.clip(jnp.round(v * inv_scale) + offset, Q_MIN, Q_MAX)
    return (q - offset) * scale


def _quant_params(min_val, max_val):
    """scale, 1/scale, offset for dynamic per-tensor asymmetric fake-quant.

    Works both on plain XLA scalars (wrapper) and (1,1) arrays (in-kernel).
    Note: for near-constant tensors scale clips to CLIPMIN and offset becomes
    huge; f32 precision then matches what the torch reference does.
    """
    alpha = max_val - min_val
    beta = min_val
    scale = jnp.clip(alpha / Q_MAX, CLIPMIN, CLIPMAX)
    offset = -jnp.round(beta / scale)          # same scalar formula as torch
    inv_scale = 1.0 / scale                    # per-element divide -> multiply
    return scale, inv_scale, offset


def _tile_min(x):
    # sublane reduce then lane reduce -> (1, 1)
    return jnp.min(jnp.min(x, axis=0, keepdims=True), axis=1, keepdims=True)


def _tile_max(x):
    return jnp.max(jnp.max(x, axis=0, keepdims=True), axis=1, keepdims=True)


# ---------------------------------------------------------------------------
# Fast path: whole tensor resident in VMEM, one kernel (1 HBM read + 1 write)
# ---------------------------------------------------------------------------
def _fused_resident_kernel(x_ref, o_ref):
    x = x_ref[...].astype(jnp.float32)

    min_x = _tile_min(x)
    max_x = _tile_max(x)
    s1, i1, o1 = _quant_params(min_x, max_x)
    xq = _fq(x, s1, i1, o1)

    # fake-quant and sigmoid are monotone non-decreasing, so the range of
    # y = sigmoid(FQ(x)) is [sigmoid(FQ(min x)), sigmoid(FQ(max x))].
    y_min = jax.nn.sigmoid(_fq(min_x, s1, i1, o1))
    y_max = jax.nn.sigmoid(_fq(max_x, s1, i1, o1))
    s2, i2, o2 = _quant_params(y_min, y_max)
    yq = _fq(jax.nn.sigmoid(xq), s2, i2, o2)

    prod = xq * yq
    # SiLU is non-monotone -> the output range needs a real reduction.
    s3, i3, o3 = _quant_params(_tile_min(prod), _tile_max(prod))
    o_ref[...] = _fq(prod, s3, i3, o3).astype(o_ref.dtype)


# ---------------------------------------------------------------------------
# Large-tensor path, pass A: per-tile partial min/max of x (fully parallel)
# ---------------------------------------------------------------------------
def _make_minmax_x_kernel(rows, tile_r, needs_mask):
    def kernel(x_ref, min_ref, max_ref):
        x = x_ref[...].astype(jnp.float32)
        if needs_mask:
            row = jax.lax.broadcasted_iota(jnp.int32, (tile_r, LANES), 0)
            valid = (pl.program_id(0) * tile_r + row) < rows
            x_for_min = jnp.where(valid, x, jnp.inf)
            x_for_max = jnp.where(valid, x, -jnp.inf)
        else:
            x_for_min = x
            x_for_max = x
        min_ref[...] = jnp.broadcast_to(
            jnp.min(x_for_min, axis=0, keepdims=True), (SUBLANES, LANES))
        max_ref[...] = jnp.broadcast_to(
            jnp.max(x_for_max, axis=0, keepdims=True), (SUBLANES, LANES))
    return kernel


# ---------------------------------------------------------------------------
# Pass B: per-tile partial min/max of xq * yq (output-quantizer range)
# ---------------------------------------------------------------------------
def _make_minmax_prod_kernel(rows, tile_r, needs_mask):
    def kernel(params_ref, x_ref, min_ref, max_ref):
        s1, i1, o1 = params_ref[0], params_ref[1], params_ref[2]
        s2, i2, o2 = params_ref[3], params_ref[4], params_ref[5]

        x = x_ref[...].astype(jnp.float32)
        xq = _fq(x, s1, i1, o1)
        yq = _fq(jax.nn.sigmoid(xq), s2, i2, o2)
        prod = xq * yq

        if needs_mask:
            row = jax.lax.broadcasted_iota(jnp.int32, (tile_r, LANES), 0)
            valid = (pl.program_id(0) * tile_r + row) < rows
            p_for_min = jnp.where(valid, prod, jnp.inf)
            p_for_max = jnp.where(valid, prod, -jnp.inf)
        else:
            p_for_min = prod
            p_for_max = prod
        min_ref[...] = jnp.broadcast_to(
            jnp.min(p_for_min, axis=0, keepdims=True), (SUBLANES, LANES))
        max_ref[...] = jnp.broadcast_to(
            jnp.max(p_for_max, axis=0, keepdims=True), (SUBLANES, LANES))
    return kernel


# ---------------------------------------------------------------------------
# Pass C: fused elementwise apply (FQ_in -> sigmoid -> FQ_in2 -> mul -> FQ_out)
# Ragged last tile needs no mask: Pallas drops OOB output rows.
# ---------------------------------------------------------------------------
def _apply_kernel(params_ref, x_ref, o_ref):
    s1, i1, o1 = params_ref[0], params_ref[1], params_ref[2]
    s2, i2, o2 = params_ref[3], params_ref[4], params_ref[5]
    s3, i3, o3 = params_ref[6], params_ref[7], params_ref[8]

    x = x_ref[...].astype(jnp.float32)
    xq = _fq(x, s1, i1, o1)
    yq = _fq(jax.nn.sigmoid(xq), s2, i2, o2)
    o_ref[...] = _fq(xq * yq, s3, i3, o3).astype(o_ref.dtype)


# ---------------------------------------------------------------------------
# Wrapper
# ---------------------------------------------------------------------------
@functools.partial(jax.jit, static_argnames=("force_multipass",))
def qsilu(x, force_multipass=False):
    """x: float array (e.g. NCHW).  Returns QSiLU(x), same shape/dtype."""
    orig_shape = x.shape
    orig_dtype = x.dtype
    total = x.size

    # Lane-dense slab in the ORIGINAL dtype (no wrapper-side f32 upcast).
    # total % 128 == 0 (common activation case): free reshape, no pad, no slice.
    # Otherwise: small edge pad (replicates a real element -> min/max exact).
    if total % LANES == 0:
        rows = total // LANES
        x2d = x.reshape(rows, LANES)
        padded = False
    else:
        rows = (total + LANES - 1) // LANES
        xf = jnp.pad(x.reshape(-1), (0, rows * LANES - total), mode="edge")
        x2d = xf.reshape(rows, LANES)
        padded = True

    if total <= FAST_PATH_MAX_ELEMS and not force_multipass:
        # ---- fully VMEM-resident single-kernel fast path --------------------
        full_spec = pl.BlockSpec((rows, LANES), lambda i: (0, 0))
        out2d = pl.pallas_call(
            _fused_resident_kernel,
            out_shape=jax.ShapeDtypeStruct((rows, LANES), orig_dtype),
            grid=(1,),
            in_specs=[full_spec],
            out_specs=full_spec,
            compiler_params=pltpu.CompilerParams(
                dimension_semantics=("arbitrary",),
                vmem_limit_bytes=VMEM_LIMIT_BYTES),
        )(x2d)
    else:
        # ---- tiled, pipelined 3-pass path ------------------------------------
        tile_r = min(TILE_ROWS, _round_up(rows, SUBLANES))
        if rows >= SUBLANES:
            tile_r = min(tile_r, (rows // SUBLANES) * SUBLANES)
        num_tiles = (rows + tile_r - 1) // tile_r
        needs_mask = (rows % tile_r) != 0
        grid = (num_tiles,)

        tile_spec = pl.BlockSpec((tile_r, LANES), lambda i: (i, 0))
        smem_spec = pl.BlockSpec(memory_space=pltpu.MemorySpace.SMEM)
        part_shape = jax.ShapeDtypeStruct((num_tiles * SUBLANES, LANES),
                                          jnp.float32)
        part_spec = pl.BlockSpec((SUBLANES, LANES), lambda i: (i, 0))
        cparams = pltpu.CompilerParams(
            dimension_semantics=("parallel",),        # both TCs on v7x
            vmem_limit_bytes=VMEM_LIMIT_BYTES)

        # pass A: per-tile partial min/max of x
        xmin_p, xmax_p = pl.pallas_call(
            _make_minmax_x_kernel(rows, tile_r, needs_mask),
            out_shape=(part_shape, part_shape),
            grid=grid,
            in_specs=[tile_spec],
            out_specs=(part_spec, part_spec),
            compiler_params=cparams,
        )(x2d)
        min_x = jnp.min(xmin_p)    # tiny XLA reduce over (num_tiles*8, 128)
        max_x = jnp.max(xmax_p)

        s1, i1, o1 = _quant_params(min_x, max_x)
        # sigmoid quantizer range from two scalar evals (monotone shortcut).
        y_min = jax.nn.sigmoid(_fq(min_x, s1, i1, o1))
        y_max = jax.nn.sigmoid(_fq(max_x, s1, i1, o1))
        s2, i2, o2 = _quant_params(y_min, y_max)
        params12 = jnp.stack([s1, i1, o1, s2, i2, o2]).astype(jnp.float32)

        # pass B: per-tile partial min/max of xq*yq (SiLU is non-monotone)
        pmin_p, pmax_p = pl.pallas_call(
            _make_minmax_prod_kernel(rows, tile_r, needs_mask),
            out_shape=(part_shape, part_shape),
            grid=grid,
            in_specs=[smem_spec, tile_spec],
            out_specs=(part_spec, part_spec),
            compiler_params=cparams,
        )(params12, x2d)
        s3, i3, o3 = _quant_params(jnp.min(pmin_p), jnp.max(pmax_p))

        params = jnp.stack(
            [s1, i1, o1, s2, i2, o2, s3, i3, o3]).astype(jnp.float32)

        # pass C: fused elementwise apply, output directly in input dtype
        out2d = pl.pallas_call(
            _apply_kernel,
            out_shape=jax.ShapeDtypeStruct((rows, LANES), orig_dtype),
            grid=grid,
            in_specs=[smem_spec, tile_spec],
            out_specs=tile_spec,
            compiler_params=cparams,
        )(params, x2d)

    if padded:
        out = out2d.reshape(-1)[:total].reshape(orig_shape)
    else:
        out = out2d.reshape(orig_shape)
    return out


# ---------------------------------------------------------------------------
# Pure-JAX reference mirroring the PyTorch forward (eval-mode semantics)
# ---------------------------------------------------------------------------
def _fake_quant_ref(x):
    min_val = jnp.min(x)
    max_val = jnp.max(x)
    alpha = max_val - min_val
    beta = min_val
    scale = jnp.clip(alpha / Q_MAX, CLIPMIN, CLIPMAX)
    offset = -jnp.round(beta / scale)
    xq = jnp.clip(jnp.round(x / scale) + offset, Q_MIN, Q_MAX)
    return (xq - offset) * scale


def _qsilu_ref(x):
    xf = x.astype(jnp.float32)
    xq = _fake_quant_ref(xf)
    y = jax.nn.sigmoid(xq)
    yq = _fake_quant_ref(y)
    out = xq * yq
    return _fake_quant_ref(out).astype(x.dtype)


# TODO(synk): training-time pieces (round_ste straight-through gradient, LWC
# learnable clipping, scale/offset caching modes) are not translated; only the
# dynamic eval-mode forward is implemented.

if __name__ == "__main__":
    key = jax.random.PRNGKey(0)
    cases = [
        # (name, shape, force_multipass)
        ("fast_path_nchw", (2, 4, 16, 16), False),       # resident fast path
        ("multipass_single_tile", (2, 4, 16, 16), True),  # 3-pass, no mask
        ("multipass_masked_tail", (20, 128), True),       # 3-pass, ragged tile
        ("fast_path_ragged", (7, 300), False),            # pad fallback path
    ]
    for name, shape, force in cases:
        key, sub = jax.random.split(key)
        x = jax.random.normal(sub, shape, dtype=jnp.float32) * 3.0

        out = jax.block_until_ready(qsilu(x, force_multipass=force))
        ref = jax.block_until_ready(_qsilu_ref(x))

        assert out.shape == x.shape and out.dtype == x.dtype, name

        diff = jnp.abs(out - ref)
        # One output quantization step (granularity of the final fake-quant).
        step = float((jnp.max(ref) - jnp.min(ref)) / Q_MAX)
        # Kernel and reference can only disagree through ulp-level round()
        # boundary flips inside the quantizers (reciprocal-multiply vs divide,
        # fused vs unfused transcendentals): at most a few quantization steps
        # per element, mean error far below one step.
        assert float(jnp.max(diff)) <= 5.0 * step + 1e-4, (name, float(jnp.max(diff)))
        assert float(jnp.mean(diff)) <= 1.0 * step + 1e-5, (name, float(jnp.mean(diff)))

    print("KERNEL_OK")
</pallas_src>

<mosaic_0001>
module attributes {stable_mosaic.version = 11 : i64} {
  func.func @_fused_resident_kernel(%arg0: i32, %arg1: memref<16x128xf32, #tpu.memory_space<vmem>>, %arg2: memref<16x128xf32, #tpu.memory_space<vmem>>) attributes {dimension_semantics = [#tpu.dimension_semantics<arbitrary>], iteration_bounds = array<i64: 1>, scalar_prefetch = 0 : i64, scratch_operands = 0 : i64, tpu.core_type = #tpu.core_type<tc>, window_params = [{pipeline_mode = #tpu.pipeline_mode<synchronous>, transform_indices = @transform_0, window_bounds = array<i64: 16, 128>}, {pipeline_mode = #tpu.pipeline_mode<synchronous>, transform_indices = @transform_1, window_bounds = array<i64: 16, 128>}]} {
    %c0 = arith.constant 0 : index
    %c0_0 = arith.constant 0 : index
    %0 = vector.load %arg1[%c0, %c0_0] : memref<16x128xf32, #tpu.memory_space<vmem>>, vector<16x128xf32>
    %cst = arith.constant dense<0x7F800000> : vector<128xf32>
    %1 = vector.multi_reduction <minimumf>, %0, %cst [0] : vector<16x128xf32> to vector<128xf32>
    %2 = vector.shape_cast %1 : vector<128xf32> to vector<1x128xf32>
    %cst_1 = arith.constant dense<0x7F800000> : vector<1xf32>
    %3 = vector.multi_reduction <minimumf>, %2, %cst_1 [1] : vector<1x128xf32> to vector<1xf32>
    %4 = vector.shape_cast %3 : vector<1xf32> to vector<1x1xf32>
    %cst_2 = arith.constant dense<0xFF800000> : vector<128xf32>
    %5 = vector.multi_reduction <maximumf>, %0, %cst_2 [0] : vector<16x128xf32> to vector<128xf32>
    %6 = vector.shape_cast %5 : vector<128xf32> to vector<1x128xf32>
    %cst_3 = arith.constant dense<0xFF800000> : vector<1xf32>
    %7 = vector.multi_reduction <maximumf>, %6, %cst_3 [1] : vector<1x128xf32> to vector<1xf32>
    %8 = vector.shape_cast %7 : vector<1xf32> to vector<1x1xf32>
    %9 = arith.subf %8, %4 : vector<1x1xf32>
    %cst_4 = arith.constant 2.550000e+02 : f32
    %10 = vector.broadcast %cst_4 : f32 to vector<1x1xf32>
    %11 = arith.divf %9, %10 : vector<1x1xf32>
    %cst_5 = arith.constant 9.99999974E-6 : f32
    %cst_6 = arith.constant 1.000000e+06 : f32
    %12 = vector.broadcast %cst_5 : f32 to vector<1x1xf32>
    %13 = arith.maximumf %12, %11 : vector<1x1xf32>
    %14 = vector.broadcast %cst_6 : f32 to vector<1x1xf32>
    %15 = arith.minimumf %14, %13 : vector<1x1xf32>
    %16 = arith.divf %4, %15 : vector<1x1xf32>
    %17 = math.roundeven %16 : vector<1x1xf32>
    %cst_7 = arith.constant 0.000000e+00 : f32
    %18 = vector.broadcast %cst_7 : f32 to vector<1x1xf32>
    %19 = arith.subf %18, %17 : vector<1x1xf32>
    %cst_8 = arith.constant 1.000000e+00 : f32
    %20 = vector.broadcast %cst_8 : f32 to vector<1x1xf32>
    %21 = arith.divf %20, %15 : vector<1x1xf32>
    %22 = vector.broadcast %21 : vector<1x1xf32> to vector<16x128xf32>
    %23 = arith.mulf %0, %22 : vector<16x128xf32>
    %24 = math.roundeven %23 : vector<16x128xf32>
    %25 = vector.broadcast %19 : vector<1x1xf32> to vector<16x128xf32>
    %26 = arith.addf %24, %25 : vector<16x128xf32>
    %cst_9 = arith.constant 0.000000e+00 : f32
    %cst_10 = arith.constant 2.550000e+02 : f32
    %27 = vector.broadcast %cst_9 : f32 to vector<16x128xf32>
    %28 = arith.maximumf %27, %26 : vector<16x128xf32>
    %29 = vector.broadcast %cst_10 : f32 to vector<16x128xf32>
    %30 = arith.minimumf %29, %28 : vector<16x128xf32>
    %31 = vector.broadcast %19 : vector<1x1xf32> to vector<16x128xf32>
    %32 = arith.subf %30, %31 : vector<16x128xf32>
    %33 = vector.broadcast %15 : vector<1x1xf32> to vector<16x128xf32>
    %34 = arith.mulf %32, %33 : vector<16x128xf32>
    %35 = arith.mulf %4, %21 : vector<1x1xf32>
    %36 = math.roundeven %35 : vector<1x1xf32>
    %37 = arith.addf %36, %19 : vector<1x1xf32>
    %cst_11 = arith.constant 0.000000e+00 : f32
    %cst_12 = arith.constant 2.550000e+02 : f32
    %38 = vector.broadcast %cst_11 : f32 to vector<1x1xf32>
    %39 = arith.maximumf %38, %37 : vector<1x1xf32>
    %40 = vector.broadcast %cst_12 : f32 to vector<1x1xf32>
    %41 = arith.minimumf %40, %39 : vector<1x1xf32>
    %42 = arith.subf %41, %19 : vector<1x1xf32>
    %43 = arith.mulf %42, %15 : vector<1x1xf32>
    %44 = arith.negf %43 : vector<1x1xf32>
    %45 = math.exp %44 : vector<1x1xf32>
    %cst_13 = arith.constant 1.000000e+00 : f32
    %46 = vector.broadcast %cst_13 : f32 to vector<1x1xf32>
    %47 = arith.addf %46, %45 : vector<1x1xf32>
    %48 = arith.divf %46, %47 : vector<1x1xf32>
    %49 = arith.mulf %8, %21 : vector<1x1xf32>
    %50 = math.roundeven %49 : vector<1x1xf32>
    %51 = arith.addf %50, %19 : vector<1x1xf32>
    %cst_14 = arith.constant 0.000000e+00 : f32
    %cst_15 = arith.constant 2.550000e+02 : f32
    %52 = vector.broadcast %cst_14 : f32 to vector<1x1xf32>
    %53 = arith.maximumf %52, %51 : vector<1x1xf32>
    %54 = vector.broadcast %cst_15 : f32 to vector<1x1xf32>
    %55 = arith.minimumf %54, %53 : vector<1x1xf32>
    %56 = arith.subf %55, %19 : vector<1x1xf32>
    %57 = arith.mulf %56, %15 : vector<1x1xf32>
    %58 = arith.negf %57 : vector<1x1xf32>
    %59 = math.exp %58 : vector<1x1xf32>
    %cst_16 = arith.constant 1.000000e+00 : f32
    %60 = vector.broadcast %cst_16 : f32 to vector<1x1xf32>
    %61 = arith.addf %60, %59 : vector<1x1xf32>
    %62 = arith.divf %60, %61 : vector<1x1xf32>
    %63 = arith.subf %62, %48 : vector<1x1xf32>
    %cst_17 = arith.constant 2.550000e+02 : f32
    %64 = vector.broadcast %cst_17 : f32 to vector<1x1xf32>
    %65 = arith.divf %63, %64 : vector<1x1xf32>
    %cst_18 = arith.constant 9.99999974E-6 : f32
    %cst_19 = arith.constant 1.000000e+06 : f32
    %66 = vector.broadcast %cst_18 : f32 to vector<1x1xf32>
    %67 = arith.maximumf %66, %65 : vector<1x1xf32>
    %68 = vector.broadcast %cst_19 : f32 to vector<1x1xf32>
    %69 = arith.minimumf %68, %67 : vector<1x1xf32>
    %70 = arith.divf %48, %69 : vector<1x1xf32>
    %71 = math.roundeven %70 : vector<1x1xf32>
    %cst_20 = arith.constant 0.000000e+00 : f32
    %72 = vector.broadcast %cst_20 : f32 to vector<1x1xf32>
    %73 = arith.subf %72, %71 : vector<1x1xf32>
    %cst_21 = arith.constant 1.000000e+00 : f32
    %74 = vector.broadcast %cst_21 : f32 to vector<1x1xf32>
    %75 = arith.divf %74, %69 : vector<1x1xf32>
    %76 = arith.negf %34 : vector<16x128xf32>
    %77 = math.exp %76 : vector<16x128xf32>
    %cst_22 = arith.constant 1.000000e+00 : f32
    %78 = vector.broadcast %cst_22 : f32 to vector<16x128xf32>
    %79 = arith.addf %78, %77 : vector<16x128xf32>
    %80 = arith.divf %78, %79 : vector<16x128xf32>
    %81 = vector.broadcast %75 : vector<1x1xf32> to vector<16x128xf32>
    %82 = arith.mulf %80, %81 : vector<16x128xf32>
    %83 = math.roundeven %82 : vector<16x128xf32>
    %84 = vector.broadcast %73 : vector<1x1xf32> to vector<16x128xf32>
    %85 = arith.addf %83, %84 : vector<16x128xf32>
    %cst_23 = arith.constant 0.000000e+00 : f32
    %cst_24 = arith.constant 2.550000e+02 : f32
    %86 = vector.broadcast %cst_23 : f32 to vector<16x128xf32>
    %87 = arith.maximumf %86, %85 : vector<16x128xf32>
    %88 = vector.broadcast %cst_24 : f32 to vector<16x128xf32>
    %89 = arith.minimumf %88, %87 : vector<16x128xf32>
    %90 = vector.broadcast %73 : vector<1x1xf32> to vector<16x128xf32>
    %91 = arith.subf %89, %90 : vector<16x128xf32>
    %92 = vector.broadcast %69 : vector<1x1xf32> to vector<16x128xf32>
    %93 = arith.mulf %91, %92 : vector<16x128xf32>
    %94 = arith.mulf %34, %93 : vector<16x128xf32>
    %cst_25 = arith.constant dense<0x7F800000> : vector<128xf32>
    %95 = vector.multi_reduction <minimumf>, %94, %cst_25 [0] : vector<16x128xf32> to vector<128xf32>
    %96 = vector.shape_cast %95 : vector<128xf32> to vector<1x128xf32>
    %cst_26 = arith.constant dense<0x7F800000> : vector<1xf32>
    %97 = vector.multi_reduction <minimumf>, %96, %cst_26 [1] : vector<1x128xf32> to vector<1xf32>
    %98 = vector.shape_cast %97 : vector<1xf32> to vector<1x1xf32>
    %cst_27 = arith.constant dense<0xFF800000> : vector<128xf32>
    %99 = vector.multi_reduction <maximumf>, %94, %cst_27 [0] : vector<16x128xf32> to vector<128xf32>
    %100 = vector.shape_cast %99 : vector<128xf32> to vector<1x128xf32>
    %cst_28 = arith.constant dense<0xFF800000> : vector<1xf32>
    %101 = vector.multi_reduction <maximumf>, %100, %cst_28 [1] : vector<1x128xf32> to vector<1xf32>
    %102 = vector.shape_cast %101 : vector<1xf32> to vector<1x1xf32>
    %103 = arith.subf %102, %98 : vector<1x1xf32>
    %cst_29 = arith.constant 2.550000e+02 : f32
    %104 = vector.broadcast %cst_29 : f32 to vector<1x1xf32>
    %105 = arith.divf %103, %104 : vector<1x1xf32>
    %cst_30 = arith.constant 9.99999974E-6 : f32
    %cst_31 = arith.constant 1.000000e+06 : f32
    %106 = vector.broadcast %cst_30 : f32 to vector<1x1xf32>
    %107 = arith.maximumf %106, %105 : vector<1x1xf32>
    %108 = vector.broadcast %cst_31 : f32 to vector<1x1xf32>
    %109 = arith.minimumf %108, %107 : vector<1x1xf32>
    %110 = arith.divf %98, %109 : vector<1x1xf32>
    %111 = math.roundeven %110 : vector<1x1xf32>
    %cst_32 = arith.constant 0.000000e+00 : f32
    %112 = vector.broadcast %cst_32 : f32 to vector<1x1xf32>
    %113 = arith.subf %112, %111 : vector<1x1xf32>
    %cst_33 = arith.constant 1.000000e+00 : f32
    %114 = vector.broadcast %cst_33 : f32 to vector<1x1xf32>
    %115 = arith.divf %114, %109 : vector<1x1xf32>
    %116 = vector.broadcast %115 : vector<1x1xf32> to vector<16x128xf32>
    %117 = arith.mulf %94, %116 : vector<16x128xf32>
    %118 = math.roundeven %117 : vector<16x128xf32>
    %119 = vector.broadcast %113 : vector<1x1xf32> to vector<16x128xf32>
    %120 = arith.addf %118, %119 : vector<16x128xf32>
    %cst_34 = arith.constant 0.000000e+00 : f32
    %cst_35 = arith.constant 2.550000e+02 : f32
    %121 = vector.broadcast %cst_34 : f32 to vector<16x128xf32>
    %122 = arith.maximumf %121, %120 : vector<16x128xf32>
    %123 = vector.broadcast %cst_35 : f32 to vector<16x128xf32>
    %124 = arith.minimumf %123, %122 : vector<16x128xf32>
    %125 = vector.broadcast %113 : vector<1x1xf32> to vector<16x128xf32>
    %126 = arith.subf %124, %125 : vector<16x128xf32>
    %127 = vector.broadcast %109 : vector<1x1xf32> to vector<16x128xf32>
    %128 = arith.mulf %126, %127 : vector<16x128xf32>
    %c0_36 = arith.constant 0 : index
    %c0_37 = arith.constant 0 : index
    %129 = vector.load %arg2[%c0_36, %c0_37] : memref<16x128xf32, #tpu.memory_space<vmem>>, vector<16x128xf32>
    tpu.vector_store %arg2[%c0_36, %c0_37], %128 {strides = array<i32>} : memref<16x128xf32, #tpu.memory_space<vmem>>, vector<16x128xf32>,
    return
  }
  func.func @transform_0(%arg0: i32) -> (i32, i32) {
    %c0_i32 = arith.constant 0 : i32
    %c0_i32_0 = arith.constant 0 : i32
    %c0_i32_1 = arith.constant 0 : i32
    return %c0_i32, %c0_i32_0 : i32, i32
  }
  func.func @transform_1(%arg0: i32) -> (i32, i32) {
    %c0_i32 = arith.constant 0 : i32
    %c0_i32_0 = arith.constant 0 : i32
    %c0_i32_1 = arith.constant 0 : i32
    return %c0_i32, %c0_i32_0 : i32, i32
  }
}

</mosaic_0001>

<llo_original>
// kernel: qsilu.1
$region0: #{qsilu.1}
  #allocation0 [shape = 'u32[]', space=smem, size = 0x4, offset = 0x4, fixed_abs, tag = 'smem constant byte address 0x4 - core index']
  #allocation1 [shape = 'u32[144,128]{1,0:T(1,128)}', space=vmem, size = 0x12000, scoped, tag = 'internal scratch']
  %s0 = inlined_call_operand.vmem [shape: f32[16,128], index: 0, kind: input, shape index: {}]
  %s1 = inlined_call_operand.vmem [shape: f32[16,128], index: 1, kind: output, shape index: {}]
  %s2 = sld [smem:[#allocation0]]
  $region14: #{qsilu.1} parent=0
    _
  %s4 = ssub.s32 1, %s2
  %s5 = scalar_select 0, %s4, %s2
  // Predicated region
  $region2: #{qsilu.1} parent=0 // pred_check
    _
  $region3: #{qsilu.1} parent=0 // pred_check_branch
    %7 = sbr.rel (0) target = $region5
  $region4: #{qsilu.1} parent=0 // pred_region
    _
  $region5: #{qsilu.1} parent=0 // pred_fallthru
    _
  %v8 = vld [vmem:[%s0] sm:$0xff]
  %v9 = vld [vmem:[%s0 + $0x8] sm:$0xff]
  %v10 = vmin.f32 %v8, %v9
  %v11 = vrot.slane %v10, 4
  %v12 = vmin.f32 %v10, %v11
  %v13 = vrot.slane %v12, 2
  %v14 = vmin.f32 %v12, %v13
  %v15 = vrot.slane %v14, 1
  %v16 = vmin.f32 %v14, %v15
  %17 = vmin.xlane.f32.xlu0 %v16
  %v18 = vpop.xlane.xlu0 %17
  %v19 = vmax.f32 %v8, %v9
  %v20 = vrot.slane %v19, 4
  %v21 = vmax.f32 %v19, %v20
  %v22 = vrot.slane %v21, 2
  %v23 = vmax.f32 %v21, %v22
  %v24 = vrot.slane %v23, 1
  %v25 = vmax.f32 %v23, %v24
  %26 = vmax.xlane.f32.xlu0 %v25
  %v27 = vpop.xlane.xlu0 %26
  %v28 = vsub.f32 %v27, %v18
  %v29 = vrcp.pop 255.0
  %v30 = vmul.f32 %v28, %v29
  %v31 = vmax.f32 %v30, 1e-05
  %v32 = vmin.f32 %v31, 1000000.0
  %v33 = vrcp.pop %v32
  %v34 = vmul.f32 %v18, %v33
  %v35 = vround.ne.pseudo %v34
  %v36 = vsub.f32 0.0, %v35
  %v37 = vmul.f32 1.0, %v33
  %v38 = vmul.f32 %v8, %v37
  %v39 = vmul.f32 %v9, %v37
  %v40 = vround.ne.pseudo %v38
  %v41 = vround.ne.pseudo %v39
  %v42 = vadd.f32 %v40, %v36
  %v43 = vadd.f32 %v41, %v36
  %v44 = vmax.f32 %v42, 0.0
  %v45 = vmax.f32 %v43, 0.0
  %v46 = vmin.f32 %v44, 255.0
  %v47 = vmin.f32 %v45, 255.0
  %v48 = vsub.f32 %v46, %v36
  %v49 = vsub.f32 %v47, %v36
  %v50 = vmul.f32 %v48, %v32
  %v51 = vmul.f32 %v49, %v32
  %v52 = vmul.f32 %v18, %v37
  %v53 = vround.ne.pseudo %v52
  %v54 = vadd.f32 %v53, %v36
  %v55 = vmax.f32 %v54, 0.0
  %v56 = vmin.f32 %v55, 255.0
  %v57 = vsub.f32 %v56, %v36
  %v58 = vmul.f32 %v57, %v32
  %v59 = vxor.u32 %v58, 2147483648
  %v60 = vmul.f32 %v59, 1.442695
  %v61 = vpow.pop %v60
  %v62 = vadd.f32 %v61, 1.0
  %v63 = vrcp.pop %v62
  %v64 = vmul.f32 1.0, %v63
  %v65 = vmul.f32 %v27, %v37
  %v66 = vround.ne.pseudo %v65
  %v67 = vadd.f32 %v66, %v36
  %v68 = vmax.f32 %v67, 0.0
  %v69 = vmin.f32 %v68, 255.0
  %v70 = vsub.f32 %v69, %v36
  %v71 = vmul.f32 %v70, %v32
  %v72 = vxor.u32 %v71, 2147483648
  %v73 = vmul.f32 %v72, 1.442695
  %v74 = vpow.pop %v73
  %v75 = vadd.f32 %v74, 1.0
  %v76 = vrcp.pop %v75
  %v77 = vmul.f32 1.0, %v76
  %v78 = vsub.f32 %v77, %v64
  %v79 = vmul.f32 %v78, %v29
  %v80 = vmax.f32 %v79, 1e-05
  %v81 = vmin.f32 %v80, 1000000.0
  %v82 = vrcp.pop %v81
  %v83 = vmul.f32 %v64, %v82
  %v84 = vround.ne.pseudo %v83
  %v85 = vsub.f32 0.0, %v84
  %v86 = vmul.f32 1.0, %v82
  %v87 = vxor.u32 %v50, 2147483648
  %v88 = vxor.u32 %v51, 2147483648
  %v89 = vmul.f32 %v87, 1.442695
  %v90 = vpow.pop %v89
  %v91 = vmul.f32 %v88, 1.442695
  %v92 = vpow.pop %v91
  %v93 = vadd.f32 %v90, 1.0
  %v94 = vadd.f32 %v92, 1.0
  %v95 = vrcp.pop %v93
  %v96 = vmul.f32 1.0, %v95
  %v97 = vrcp.pop %v94
  %v98 = vmul.f32 1.0, %v97
  %v99 = vmul.f32 %v96, %v86
  %v100 = vmul.f32 %v98, %v86
  %v101 = vround.ne.pseudo %v99
  %v102 = vround.ne.pseudo %v100
  %v103 = vadd.f32 %v101, %v85
  %v104 = vadd.f32 %v102, %v85
  %v105 = vmax.f32 %v103, 0.0
  %v106 = vmax.f32 %v104, 0.0
  %v107 = vmin.f32 %v105, 255.0
  %v108 = vmin.f32 %v106, 255.0
  %v109 = vsub.f32 %v107, %v85
  %v110 = vsub.f32 %v108, %v85
  %v111 = vmul.f32 %v109, %v81
  %v112 = vmul.f32 %v110, %v81
  %v113 = vmul.f32 %v50, %v111
  %v114 = vmul.f32 %v51, %v112
  %v115 = vmin.f32 %v113, %v114
  %v116 = vrot.slane %v115, 4
  %v117 = vmin.f32 %v115, %v116
  %v118 = vrot.slane %v117, 2
  %v119 = vmin.f32 %v117, %v118
  %v120 = vrot.slane %v119, 1
  %v121 = vmin.f32 %v119, %v120
  %122 = vmin.xlane.f32.xlu0 %v121
  %v123 = vpop.xlane.xlu0 %122
  %v124 = vmax.f32 %v113, %v114
  %v125 = vrot.slane %v124, 4
  %v126 = vmax.f32 %v124, %v125
  %v127 = vrot.slane %v126, 2
  %v128 = vmax.f32 %v126, %v127
  %v129 = vrot.slane %v128, 1
  %v130 = vmax.f32 %v128, %v129
  %131 = vmax.xlane.f32.xlu0 %v130
  %v132 = vpop.xlane.xlu0 %131
  %v133 = vsub.f32 %v132, %v123
  %v134 = vmul.f32 %v133, %v29
  %v135 = vmax.f32 %v134, 1e-05
  %v136 = vmin.f32 %v135, 1000000.0
  %v137 = vrcp.pop %v136
  %v138 = vmul.f32 %v123, %v137
  %v139 = vround.ne.pseudo %v138
  %v140 = vsub.f32 0.0, %v139
  %v141 = vmul.f32 1.0, %v137
  %v142 = vmul.f32 %v113, %v141
  %v143 = vmul.f32 %v114, %v141
  %v144 = vround.ne.pseudo %v142
  %v145 = vround.ne.pseudo %v143
  %v146 = vadd.f32 %v144, %v140
  %v147 = vadd.f32 %v145, %v140
  %v148 = vmax.f32 %v146, 0.0
  %v149 = vmax.f32 %v147, 0.0
  %v150 = vmin.f32 %v148, 255.0
  %v151 = vmin.f32 %v149, 255.0
  %v152 = vsub.f32 %v150, %v140
  %v153 = vsub.f32 %v151, %v140
  %v154 = vmul.f32 %v152, %v136
  %v155 = vmul.f32 %v153, %v136
  %156 = vst [vmem:[%s1] sm:$0xff] %v154
  %157 = vst [vmem:[%s1 + $0x8] sm:$0xff] %v155
  // Predicated region
  $region6: #{qsilu.1} parent=0 // pred_check
    _
  $region7: #{qsilu.1} parent=0 // pred_check_branch
    %159 = sbr.rel (0) target = $region9
  $region8: #{qsilu.1} parent=0 // pred_region
    _
  $region9: #{qsilu.1} parent=0 // pred_fallthru
    _
  // Predicated region
  $region10: #{qsilu.1} parent=0 // pred_check
    _
  $region11: #{qsilu.1} parent=0 // pred_check_branch
    %161 = sbr.rel (0) target = $region13
  $region12: #{qsilu.1} parent=0 // pred_region
    _
  $region13: #{qsilu.1} parent=0 // pred_fallthru
    _

</llo_original>
